<compile_context>
chip_gen: v6e
topology: v6e:2x2x1
jax: 0.10.0
libtpu: 0.0.40
codegen_flags: <defaults>
</compile_context>

<pallas_src>
import jax
import jax.numpy as jnp
from jax.experimental import pallas as pl
from jax.experimental.pallas import tpu as pltpu

NUM_CLASSES = 10
IN_FEATURES = 256   # embedding dim produced by the (stubbed) LID encoder
HIDDEN = 512        # fixed by the module: nn.Linear(in_features, 512)
C_PAD = 128         # lane-dense padded class width (sliced back to NUM_CLASSES)
MIN_TB = 16         # bf16 sublane-pack friendly minimum batch tile
MAX_TB = 512        # cap; VMEM footprint at 512 rows is ~1 MiB, far under any gen's limit


def _round_up(x, m):
    return ((x + m - 1) // m) * m


def _choose_batch_tiling(b):
    """Pick (TB, BP): TB multiple of 16, >=2 grid steps when padded batch > one tile,
    TB <= MAX_TB, and padding waste bounded (no 'pad 260 -> 512' blowups)."""
    b_pad = _round_up(max(b, 1), MIN_TB)
    if b_pad <= MIN_TB:
        return b_pad, b_pad
    num_tiles = max(2, -(-b_pad // MAX_TB))
    tb = _round_up(-(-b_pad // num_tiles), MIN_TB)
    return tb, tb * num_tiles


def _head_kernel(x_ref, w1_ref, b1_ref, w2_ref, b2_ref, o_ref):
    """[proj folded into w1] -> Linear(D,512) -> ReLU -> Linear(512,C_PAD) on one VMEM tile.

    bf16 matmul operands (MXU fast path), float32 bias/ReLU/accumulation.
    """
    h = jnp.dot(x_ref[...], w1_ref[...],
                preferred_element_type=jnp.float32)              # (TB, 512) f32 acc
    h = jnp.maximum(h + b1_ref[...], 0.0)                        # bias + ReLU in f32
    logits = jnp.dot(h.astype(jnp.bfloat16), w2_ref[...],
                     preferred_element_type=jnp.float32)         # (TB, C_PAD) f32 acc
    o_ref[...] = logits + b2_ref[...]


def fused_lid_head(frames_p, w1, b1, w2, b2, tb):
    """frames_p: (BP, D) bf16, BP a multiple of tb. Returns (BP, C_PAD) f32 logits."""
    BP, D = frames_p.shape
    H = w1.shape[1]
    C = w2.shape[1]
    grid = (BP // tb,)

    flops = 2 * BP * (D * H + H * C)
    bytes_accessed = (2 * (frames_p.size + w1.size + w2.size)      # bf16 streams
                      + 4 * (b1.size + b2.size + BP * C))          # f32 biases + output

    return pl.pallas_call(
        _head_kernel,
        out_shape=jax.ShapeDtypeStruct((BP, C), jnp.float32),
        grid_spec=pltpu.PrefetchScalarGridSpec(
            num_scalar_prefetch=0,
            grid=grid,
            in_specs=[
                pl.BlockSpec((tb, D), lambda i: (i, 0)),          # frames tile (bf16)
                pl.BlockSpec((D, H), lambda i: (0, 0)),           # folded W1   (bf16, resident)
                pl.BlockSpec((1, H), lambda i: (0, 0)),           # b1          (f32,  resident)
                pl.BlockSpec((H, C), lambda i: (0, 0)),           # padded W2   (bf16, resident)
                pl.BlockSpec((1, C), lambda i: (0, 0)),           # padded b2   (f32,  resident)
            ],
            out_specs=pl.BlockSpec((tb, C), lambda i: (i, 0)),    # lane-dense 128-wide store
        ),
        compiler_params=pltpu.CompilerParams(
            dimension_semantics=("parallel",)),
        cost_estimate=pl.CostEstimate(flops=flops, transcendentals=0,
                                      bytes_accessed=bytes_accessed),
    )(frames_p, w1, b1, w2, b2)


def encode_frames(wav):
    """Deterministic frame-pool stand-in for the frozen encoder's front-end.
    Trims T to a multiple of IN_FEATURES so the reshape is always valid."""
    # TODO(synk): the frozen SpeechBrain ECAPA-TDNN encoder (lid.encode_batch) is not
    # translated; this stub only reproduces the (B, D) embedding shape/dtype contract.
    B, T = wav.shape
    t_trim = (T // IN_FEATURES) * IN_FEATURES
    frames = wav[:, :t_trim].reshape(B, IN_FEATURES, t_trim // IN_FEATURES)
    return frames.mean(axis=-1)                                   # (B, IN_FEATURES) f32


def prepare_params(params):
    """One-time weight preparation (hoisted out of the per-call forward):
    fold the frozen encoder projection into fc1 (f32, then bf16), pad fc2 to 128 lanes."""
    w1_folded = jnp.dot(params["encoder_proj"], params["w1"],
                        preferred_element_type=jnp.float32)        # fold in f32 first
    w2_pad = jnp.zeros((HIDDEN, C_PAD), jnp.float32).at[:, :NUM_CLASSES].set(params["w2"])
    b2_pad = jnp.zeros((1, C_PAD), jnp.float32).at[:, :NUM_CLASSES].set(params["b2"])
    return {
        "w1": w1_folded.astype(jnp.bfloat16),                      # (D, 512)  bf16
        "b1": params["b1"].astype(jnp.float32),                    # (1, 512)  f32
        "w2": w2_pad.astype(jnp.bfloat16),                         # (512,128) bf16
        "b2": b2_pad,                                              # (1, 128)  f32
    }


@jax.jit
def custom_lid_forward(wav, prep):
    B = wav.shape[0]
    # with torch.no_grad(): features = lid.encode_batch(wav); features.squeeze(1)
    frames = encode_frames(wav).astype(jnp.bfloat16)               # (B, D) bf16

    tb, bp = _choose_batch_tiling(B)
    frames_p = jnp.zeros((bp, IN_FEATURES), jnp.bfloat16).at[:B].set(frames)

    logits_p = fused_lid_head(frames_p, prep["w1"], prep["b1"], prep["w2"], prep["b2"], tb)
    return logits_p[:B, :NUM_CLASSES]


def init_params(key):
    k0, k1, k2, k3, k4 = jax.random.split(key, 5)
    lim1 = 1.0 / jnp.sqrt(IN_FEATURES)
    lim2 = 1.0 / jnp.sqrt(HIDDEN)
    return {
        "encoder_proj": jax.random.normal(k0, (IN_FEATURES, IN_FEATURES), jnp.float32) * 0.02,
        "w1": jax.random.uniform(k1, (IN_FEATURES, HIDDEN), jnp.float32, -lim1, lim1),
        "b1": jax.random.uniform(k2, (1, HIDDEN), jnp.float32, -lim1, lim1),
        "w2": jax.random.uniform(k3, (HIDDEN, NUM_CLASSES), jnp.float32, -lim2, lim2),
        "b2": jax.random.uniform(k4, (1, NUM_CLASSES), jnp.float32, -lim2, lim2),
    }


if __name__ == "__main__":
    key = jax.random.PRNGKey(0)
    params = init_params(key)
    prep = jax.tree_util.tree_map(jax.block_until_ready, prepare_params(params))

    # small synthetic waveform batch: (batch=2, samples=16000), like dummy_wav
    wav = jax.random.normal(jax.random.fold_in(key, 99), (2, 16000), jnp.float32)

    logits = custom_lid_forward(wav, prep)
    jax.block_until_ready(logits)

    # reference: identical math in plain JAX (same folded/bf16 weights, f32 accumulation)
    frames_ref = encode_frames(wav).astype(jnp.bfloat16)
    h_ref = jnp.dot(frames_ref, prep["w1"], preferred_element_type=jnp.float32) + prep["b1"]
    h_ref = jnp.maximum(h_ref, 0.0)
    ref = (jnp.dot(h_ref.astype(jnp.bfloat16), prep["w2"],
                   preferred_element_type=jnp.float32) + prep["b2"])[:, :NUM_CLASSES]

    assert logits.shape == (2, NUM_CLASSES)
    err = float(jnp.max(jnp.abs(logits - ref)))
    assert jnp.allclose(logits, ref, atol=1e-2, rtol=1e-2), err

    print("KERNEL_OK")
</pallas_src>

<mosaic_0001>
module attributes {stable_mosaic.version = 11 : i64} {
  func.func @_head_kernel(%arg0: i32, %arg1: memref<16x256xbf16, #tpu.memory_space<vmem>>, %arg2: memref<256x512xbf16, #tpu.memory_space<vmem>>, %arg3: memref<1x512xf32, #tpu.memory_space<vmem>>, %arg4: memref<512x128xbf16, #tpu.memory_space<vmem>>, %arg5: memref<1x128xf32, #tpu.memory_space<vmem>>, %arg6: memref<16x128xf32, #tpu.memory_space<vmem>>) attributes {dimension_semantics = [#tpu.dimension_semantics<parallel>], iteration_bounds = array<i64: 1>, scalar_prefetch = 0 : i64, scratch_operands = 0 : i64, tpu.core_type = #tpu.core_type<tc>, window_params = [{transform_indices = @transform_0, window_bounds = array<i64: 16, 256>}, {pipeline_mode = #tpu.pipeline_mode<synchronous>, transform_indices = @transform_1, window_bounds = array<i64: 256, 512>}, {pipeline_mode = #tpu.pipeline_mode<synchronous>, transform_indices = @transform_2, window_bounds = array<i64: 1, 512>}, {pipeline_mode = #tpu.pipeline_mode<synchronous>, transform_indices = @transform_3, window_bounds = array<i64: 512, 128>}, {pipeline_mode = #tpu.pipeline_mode<synchronous>, transform_indices = @transform_4, window_bounds = array<i64: 1, 128>}, {transform_indices = @transform_5, window_bounds = array<i64: 16, 128>}]} {
    %c0 = arith.constant 0 : index
    %c0_0 = arith.constant 0 : index
    %0 = vector.load %arg1[%c0, %c0_0] : memref<16x256xbf16, #tpu.memory_space<vmem>>, vector<16x256xbf16>
    %c0_1 = arith.constant 0 : index
    %c0_2 = arith.constant 0 : index
    %1 = vector.load %arg2[%c0_1, %c0_2] : memref<256x512xbf16, #tpu.memory_space<vmem>>, vector<256x512xbf16>
    %cst = arith.constant dense<0.000000e+00> : vector<16x512xf32>
    %2 = tpu.matmul %0, %1, %cst {dimension_numbers = #tpu.dot_dimension_numbers<[1], [0], [0], [1], [0, 0, 1, 1], [], []>} : vector<16x256xbf16>, vector<256x512xbf16>, vector<16x512xf32> -> vector<16x512xf32>
    %c0_3 = arith.constant 0 : index
    %c0_4 = arith.constant 0 : index
    %3 = vector.load %arg3[%c0_3, %c0_4] : memref<1x512xf32, #tpu.memory_space<vmem>>, vector<1x512xf32>
    %4 = vector.broadcast %3 : vector<1x512xf32> to vector<16x512xf32>
    %5 = arith.addf %2, %4 : vector<16x512xf32>
    %cst_5 = arith.constant 0.000000e+00 : f32
    %6 = vector.broadcast %cst_5 : f32 to vector<16x512xf32>
    %7 = arith.maximumf %5, %6 : vector<16x512xf32>
    %8 = arith.truncf %7 : vector<16x512xf32> to vector<16x512xbf16>
    %c0_6 = arith.constant 0 : index
    %c0_7 = arith.constant 0 : index
    %9 = vector.load %arg4[%c0_6, %c0_7] : memref<512x128xbf16, #tpu.memory_space<vmem>>, vector<512x128xbf16>
    %cst_8 = arith.constant dense<0.000000e+00> : vector<16x128xf32>
    %10 = tpu.matmul %8, %9, %cst_8 {dimension_numbers = #tpu.dot_dimension_numbers<[1], [0], [0], [1], [0, 0, 1, 1], [], []>} : vector<16x512xbf16>, vector<512x128xbf16>, vector<16x128xf32> -> vector<16x128xf32>
    %c0_9 = arith.constant 0 : index
    %c0_10 = arith.constant 0 : index
    %11 = vector.load %arg5[%c0_9, %c0_10] : memref<1x128xf32, #tpu.memory_space<vmem>>, vector<1x128xf32>
    %12 = vector.broadcast %11 : vector<1x128xf32> to vector<16x128xf32>
    %13 = arith.addf %10, %12 : vector<16x128xf32>
    %c0_11 = arith.constant 0 : index
    %c0_12 = arith.constant 0 : index
    %14 = vector.load %arg6[%c0_11, %c0_12] : memref<16x128xf32, #tpu.memory_space<vmem>>, vector<16x128xf32>
    tpu.vector_store %arg6[%c0_11, %c0_12], %13 {strides = array<i32>} : memref<16x128xf32, #tpu.memory_space<vmem>>, vector<16x128xf32>,
    return
  }
  func.func @transform_0(%arg0: i32) -> (i32, i32) {
    %c0_i32 = arith.constant 0 : i32
    %c0_i32_0 = arith.constant 0 : i32
    return %arg0, %c0_i32 : i32, i32
  }
  func.func @transform_1(%arg0: i32) -> (i32, i32) {
    %c0_i32 = arith.constant 0 : i32
    %c0_i32_0 = arith.constant 0 : i32
    %c0_i32_1 = arith.constant 0 : i32
    return %c0_i32, %c0_i32_0 : i32, i32
  }
  func.func @transform_2(%arg0: i32) -> (i32, i32) {
    %c0_i32 = arith.constant 0 : i32
    %c0_i32_0 = arith.constant 0 : i32
    %c0_i32_1 = arith.constant 0 : i32
    return %c0_i32, %c0_i32_0 : i32, i32
  }
  func.func @transform_3(%arg0: i32) -> (i32, i32) {
    %c0_i32 = arith.constant 0 : i32
    %c0_i32_0 = arith.constant 0 : i32
    %c0_i32_1 = arith.constant 0 : i32
    return %c0_i32, %c0_i32_0 : i32, i32
  }
  func.func @transform_4(%arg0: i32) -> (i32, i32) {
    %c0_i32 = arith.constant 0 : i32
    %c0_i32_0 = arith.constant 0 : i32
    %c0_i32_1 = arith.constant 0 : i32
    return %c0_i32, %c0_i32_0 : i32, i32
  }
  func.func @transform_5(%arg0: i32) -> (i32, i32) {
    %c0_i32 = arith.constant 0 : i32
    %c0_i32_0 = arith.constant 0 : i32
    return %arg0, %c0_i32 : i32, i32
  }
}

</mosaic_0001>

<llo_original>
// kernel: custom_lid_forward.1
$region0: #{custom_lid_forward.1}
  #allocation0 [shape = 'u32[]', space=smem, size = 0x4, offset = 0x4, fixed_abs, tag = 'smem constant byte address 0x4 - core index']
  #allocation1 [shape = 'u32[144,128]{1,0:T(1,128)}', space=vmem, size = 0x12000, scoped, tag = 'internal scratch']
  %s0 = inlined_call_operand.vmem [shape: bf16[16,256], index: 0, kind: input, shape index: {}]
  %s1 = inlined_call_operand.vmem [shape: bf16[256,512], index: 1, kind: input, shape index: {}]
  %s2 = inlined_call_operand.vmem [shape: f32[1,512], index: 2, kind: input, shape index: {}]
  %s3 = inlined_call_operand.vmem [shape: bf16[512,128], index: 3, kind: input, shape index: {}]
  %s4 = inlined_call_operand.vmem [shape: f32[1,128], index: 4, kind: input, shape index: {}]
  %s5 = inlined_call_operand.vmem [shape: f32[16,128], index: 5, kind: output, shape index: {}]
  %s6 = sld [smem:[#allocation0]]
  $region30: #{custom_lid_forward.1} parent=0
    _
  %s8 = ssub.s32 1, %s6
  %s9 = scalar_select 0, %s8, %s6
  // Predicated region
  $region2: #{custom_lid_forward.1} parent=0 // pred_check
    _
  $region3: #{custom_lid_forward.1} parent=0 // pred_check_branch
    %11 = sbr.rel (0) target = $region5
  $region4: #{custom_lid_forward.1} parent=0 // pred_region
    _
  $region5: #{custom_lid_forward.1} parent=0 // pred_fallthru
    _
  // Predicated region
  $region6: #{custom_lid_forward.1} parent=0 // pred_check
    _
  $region7: #{custom_lid_forward.1} parent=0 // pred_check_branch
    %13 = sbr.rel (0) target = $region9
  $region8: #{custom_lid_forward.1} parent=0 // pred_region
    _
  $region9: #{custom_lid_forward.1} parent=0 // pred_fallthru
    _
  // Predicated region
  $region10: #{custom_lid_forward.1} parent=0 // pred_check
    _
  $region11: #{custom_lid_forward.1} parent=0 // pred_check_branch
    %15 = sbr.rel (0) target = $region13
  $region12: #{custom_lid_forward.1} parent=0 // pred_region
    _
  $region13: #{custom_lid_forward.1} parent=0 // pred_fallthru
    _
  // Predicated region
  $region14: #{custom_lid_forward.1} parent=0 // pred_check
    _
  $region15: #{custom_lid_forward.1} parent=0 // pred_check_branch
    %17 = sbr.rel (0) target = $region17
  $region16: #{custom_lid_forward.1} parent=0 // pred_region
    _
  $region17: #{custom_lid_forward.1} parent=0 // pred_fallthru
    _
  // Predicated region
  $region18: #{custom_lid_forward.1} parent=0 // pred_check
    _
  $region19: #{custom_lid_forward.1} parent=0 // pred_check_branch
    %19 = sbr.rel (0) target = $region21
  $region20: #{custom_lid_forward.1} parent=0 // pred_region
    _
  $region21: #{custom_lid_forward.1} parent=0 // pred_fallthru
    _
  %v21 = vld [vmem:[%s0] sm:$0xff]
  %v22 = vld [vmem:[%s0 + $0x8] sm:$0xff]
  %v23 = vld [vmem:[%s1] sm:$0xff]
  %v24 = vld [vmem:[%s1 + $0x8] sm:$0xff]
  %v25 = vld [vmem:[%s1 + $0x10] sm:$0xff]
  %v26 = vld [vmem:[%s1 + $0x18] sm:$0xff]
  %v27 = vld [vmem:[%s1 + $0x20] sm:$0xff]
  %v28 = vld [vmem:[%s1 + $0x28] sm:$0xff]
  %v29 = vld [vmem:[%s1 + $0x30] sm:$0xff]
  %v30 = vld [vmem:[%s1 + $0x38] sm:$0xff]
  %v31 = vld [vmem:[%s1 + $0x40] sm:$0xff]
  %v32 = vld [vmem:[%s1 + $0x48] sm:$0xff]
  %v33 = vld [vmem:[%s1 + $0x50] sm:$0xff]
  %v34 = vld [vmem:[%s1 + $0x58] sm:$0xff]
  %v35 = vld [vmem:[%s1 + $0x60] sm:$0xff]
  %v36 = vld [vmem:[%s1 + $0x68] sm:$0xff]
  %v37 = vld [vmem:[%s1 + $0x70] sm:$0xff]
  %v38 = vld [vmem:[%s1 + $0x78] sm:$0xff]
  %v39 = vld [vmem:[%s1 + $0x80] sm:$0xff]
  %v40 = vld [vmem:[%s1 + $0x88] sm:$0xff]
  %v41 = vld [vmem:[%s1 + $0x90] sm:$0xff]
  %v42 = vld [vmem:[%s1 + $0x98] sm:$0xff]
  %v43 = vld [vmem:[%s1 + $0xa0] sm:$0xff]
  %v44 = vld [vmem:[%s1 + $0xa8] sm:$0xff]
  %v45 = vld [vmem:[%s1 + $0xb0] sm:$0xff]
  %v46 = vld [vmem:[%s1 + $0xb8] sm:$0xff]
  %v47 = vld [vmem:[%s1 + $0xc0] sm:$0xff]
  %v48 = vld [vmem:[%s1 + $0xc8] sm:$0xff]
  %v49 = vld [vmem:[%s1 + $0xd0] sm:$0xff]
  %v50 = vld [vmem:[%s1 + $0xd8] sm:$0xff]
  %v51 = vld [vmem:[%s1 + $0xe0] sm:$0xff]
  %v52 = vld [vmem:[%s1 + $0xe8] sm:$0xff]
  %v53 = vld [vmem:[%s1 + $0xf0] sm:$0xff]
  %v54 = vld [vmem:[%s1 + $0xf8] sm:$0xff]
  %v55 = vld [vmem:[%s1 + $0x100] sm:$0xff]
  %v56 = vld [vmem:[%s1 + $0x108] sm:$0xff]
  %v57 = vld [vmem:[%s1 + $0x110] sm:$0xff]
  %v58 = vld [vmem:[%s1 + $0x118] sm:$0xff]
  %v59 = vld [vmem:[%s1 + $0x120] sm:$0xff]
  %v60 = vld [vmem:[%s1 + $0x128] sm:$0xff]
  %v61 = vld [vmem:[%s1 + $0x130] sm:$0xff]
  %v62 = vld [vmem:[%s1 + $0x138] sm:$0xff]
  %v63 = vld [vmem:[%s1 + $0x140] sm:$0xff]
  %v64 = vld [vmem:[%s1 + $0x148] sm:$0xff]
  %v65 = vld [vmem:[%s1 + $0x150] sm:$0xff]
  %v66 = vld [vmem:[%s1 + $0x158] sm:$0xff]
  %v67 = vld [vmem:[%s1 + $0x160] sm:$0xff]
  %v68 = vld [vmem:[%s1 + $0x168] sm:$0xff]
  %v69 = vld [vmem:[%s1 + $0x170] sm:$0xff]
  %v70 = vld [vmem:[%s1 + $0x178] sm:$0xff]
  %v71 = vld [vmem:[%s1 + $0x180] sm:$0xff]
  %v72 = vld [vmem:[%s1 + $0x188] sm:$0xff]
  %v73 = vld [vmem:[%s1 + $0x190] sm:$0xff]
  %v74 = vld [vmem:[%s1 + $0x198] sm:$0xff]
  %v75 = vld [vmem:[%s1 + $0x1a0] sm:$0xff]
  %v76 = vld [vmem:[%s1 + $0x1a8] sm:$0xff]
  %v77 = vld [vmem:[%s1 + $0x1b0] sm:$0xff]
  %v78 = vld [vmem:[%s1 + $0x1b8] sm:$0xff]
  %v79 = vld [vmem:[%s1 + $0x1c0] sm:$0xff]
  %v80 = vld [vmem:[%s1 + $0x1c8] sm:$0xff]
  %v81 = vld [vmem:[%s1 + $0x1d0] sm:$0xff]
  %v82 = vld [vmem:[%s1 + $0x1d8] sm:$0xff]
  %v83 = vld [vmem:[%s1 + $0x1e0] sm:$0xff]
  %v84 = vld [vmem:[%s1 + $0x1e8] sm:$0xff]
  %v85 = vld [vmem:[%s1 + $0x1f0] sm:$0xff]
  %v86 = vld [vmem:[%s1 + $0x1f8] sm:$0xff]
  %v87 = vld [vmem:[%s2] sm:$0xf]
  %v89 = vlaneseq
  %v90 = vshrl.u32 %v89, 7
  %v91 = vsub.s32 0, %v90
  %v92 = vrot.slane %v87, %v91
  %v93 = vlaneseq
  %v94 = vshrl.u32 %v93, 7
  %v95 = vsub.s32 1, %v94
  %v96 = vrot.slane %v87, %v95
  %v97 = vlaneseq
  %v98 = vshrl.u32 %v97, 7
  %v99 = vsub.s32 2, %v98
  %v100 = vrot.slane %v87, %v99
  %v101 = vlaneseq
  %v102 = vshrl.u32 %v101, 7
  %v103 = vsub.s32 3, %v102
  %v104 = vrot.slane %v87, %v103
  %v111 = vunpack.c.l.b16 %v21
  %v112 = vunpack.c.h.b16 %v21
  %v113 = vunpack.c.l.b16 %v22
  %v114 = vunpack.c.h.b16 %v22
  %v115 = vpack.c.b16 %v113, %v111
  %v116 = vpack.c.b16 %v114, %v112
  %v183 = vunpack.c.l.b16 %v23
  %v184 = vunpack.c.h.b16 %v23
  %v185 = vunpack.c.l.b16 %v24
  %v186 = vunpack.c.h.b16 %v24
  %v187 = vunpack.c.l.b16 %v25
  %v188 = vunpack.c.h.b16 %v25
  %v189 = vunpack.c.l.b16 %v26
  %v190 = vunpack.c.h.b16 %v26
  %v191 = vunpack.c.l.b16 %v27
  %v192 = vunpack.c.h.b16 %v27
  %v193 = vunpack.c.l.b16 %v28
  %v194 = vunpack.c.h.b16 %v28
  %v195 = vunpack.c.l.b16 %v29
  %v196 = vunpack.c.h.b16 %v29
  %v197 = vunpack.c.l.b16 %v30
  %v198 = vunpack.c.h.b16 %v30
  %v199 = vunpack.c.l.b16 %v31
  %v200 = vunpack.c.h.b16 %v31
  %v201 = vunpack.c.l.b16 %v32
  %v202 = vunpack.c.h.b16 %v32
  %v203 = vunpack.c.l.b16 %v33
  %v204 = vunpack.c.h.b16 %v33
  %v205 = vunpack.c.l.b16 %v34
  %v206 = vunpack.c.h.b16 %v34
  %v207 = vunpack.c.l.b16 %v35
  %v208 = vunpack.c.h.b16 %v35
  %v209 = vunpack.c.l.b16 %v36
  %v210 = vunpack.c.h.b16 %v36
  %v211 = vunpack.c.l.b16 %v37
  %v212 = vunpack.c.h.b16 %v37
  %v213 = vunpack.c.l.b16 %v38
  %v214 = vunpack.c.h.b16 %v38
  %v215 = vunpack.c.l.b16 %v39
  %v216 = vunpack.c.h.b16 %v39
  %v217 = vunpack.c.l.b16 %v40
  %v218 = vunpack.c.h.b16 %v40
  %v219 = vunpack.c.l.b16 %v41
  %v220 = vunpack.c.h.b16 %v41
  %v221 = vunpack.c.l.b16 %v42
  %v222 = vunpack.c.h.b16 %v42
  %v223 = vunpack.c.l.b16 %v43
  %v224 = vunpack.c.h.b16 %v43
  %v225 = vunpack.c.l.b16 %v44
  %v226 = vunpack.c.h.b16 %v44
  %v227 = vunpack.c.l.b16 %v45
  %v228 = vunpack.c.h.b16 %v45
  %v229 = vunpack.c.l.b16 %v46
  %v230 = vunpack.c.h.b16 %v46
  %v231 = vunpack.c.l.b16 %v47
  %v232 = vunpack.c.h.b16 %v47
  %v233 = vunpack.c.l.b16 %v48
  %v234 = vunpack.c.h.b16 %v48
  %v235 = vunpack.c.l.b16 %v49
  %v236 = vunpack.c.h.b16 %v49
  %v237 = vunpack.c.l.b16 %v50
  %v238 = vunpack.c.h.b16 %v50
  %v239 = vunpack.c.l.b16 %v51
  %v240 = vunpack.c.h.b16 %v51
  %v241 = vunpack.c.l.b16 %v52
  %v242 = vunpack.c.h.b16 %v52
  %v243 = vunpack.c.l.b16 %v53
  %v244 = vunpack.c.h.b16 %v53
  %v245 = vunpack.c.l.b16 %v54
  %v246 = vunpack.c.h.b16 %v54
  %v247 = vunpack.c.l.b16 %v55
  %v248 = vunpack.c.h.b16 %v55
  %v249 = vunpack.c.l.b16 %v56
  %v250 = vunpack.c.h.b16 %v56
  %v251 = vunpack.c.l.b16 %v57
  %v252 = vunpack.c.h.b16 %v57
  %v253 = vunpack.c.l.b16 %v58
  %v254 = vunpack.c.h.b16 %v58
  %v255 = vunpack.c.l.b16 %v59
  %v256 = vunpack.c.h.b16 %v59
  %v257 = vunpack.c.l.b16 %v60
  %v258 = vunpack.c.h.b16 %v60
  %v259 = vunpack.c.l.b16 %v61
  %v260 = vunpack.c.h.b16 %v61
  %v261 = vunpack.c.l.b16 %v62
  %v262 = vunpack.c.h.b16 %v62
  %v263 = vunpack.c.l.b16 %v63
  %v264 = vunpack.c.h.b16 %v63
  %v265 = vunpack.c.l.b16 %v64
  %v266 = vunpack.c.h.b16 %v64
  %v267 = vunpack.c.l.b16 %v65
  %v268 = vunpack.c.h.b16 %v65
  %v269 = vunpack.c.l.b16 %v66
  %v270 = vunpack.c.h.b16 %v66
  %v271 = vunpack.c.l.b16 %v67
  %v272 = vunpack.c.h.b16 %v67
  %v273 = vunpack.c.l.b16 %v68
  %v274 = vunpack.c.h.b16 %v68
  %v275 = vunpack.c.l.b16 %v69
  %v276 = vunpack.c.h.b16 %v69
  %v277 = vunpack.c.l.b16 %v70
  %v278 = vunpack.c.h.b16 %v70
  %v279 = vunpack.c.l.b16 %v71
  %v280 = vunpack.c.h.b16 %v71
  %v281 = vunpack.c.l.b16 %v72
  %v282 = vunpack.c.h.b16 %v72
  %v283 = vunpack.c.l.b16 %v73
  %v284 = vunpack.c.h.b16 %v73
  %v285 = vunpack.c.l.b16 %v74
  %v286 = vunpack.c.h.b16 %v74
  %v287 = vunpack.c.l.b16 %v75
  %v288 = vunpack.c.h.b16 %v75
  %v289 = vunpack.c.l.b16 %v76
  %v290 = vunpack.c.h.b16 %v76
  %v291 = vunpack.c.l.b16 %v77
  %v292 = vunpack.c.h.b16 %v77
  %v293 = vunpack.c.l.b16 %v78
  %v294 = vunpack.c.h.b16 %v78
  %v295 = vunpack.c.l.b16 %v79
  %v296 = vunpack.c.h.b16 %v79
  %v297 = vunpack.c.l.b16 %v80
  %v298 = vunpack.c.h.b16 %v80
  %v299 = vunpack.c.l.b16 %v81
  %v300 = vunpack.c.h.b16 %v81
  %v301 = vunpack.c.l.b16 %v82
  %v302 = vunpack.c.h.b16 %v82
  %v303 = vunpack.c.l.b16 %v83
  %v304 = vunpack.c.h.b16 %v83
  %v305 = vunpack.c.l.b16 %v84
  %v306 = vunpack.c.h.b16 %v84
  %v307 = vunpack.c.l.b16 %v85
  %v308 = vunpack.c.h.b16 %v85
  %v309 = vunpack.c.l.b16 %v86
  %v310 = vunpack.c.h.b16 %v86
  %v311 = vpack.c.b16 %v187, %v183
  %v312 = vpack.c.b16 %v188, %v184
  %v313 = vpack.c.b16 %v189, %v185
  %v314 = vpack.c.b16 %v190, %v186
  %v315 = vpack.c.b16 %v195, %v191
  %v316 = vpack.c.b16 %v196, %v192
  %v317 = vpack.c.b16 %v197, %v193
  %v318 = vpack.c.b16 %v198, %v194
  %v319 = vpack.c.b16 %v203, %v199
  %v320 = vpack.c.b16 %v204, %v200
  %v321 = vpack.c.b16 %v205, %v201
  %v322 = vpack.c.b16 %v206, %v202
  %v323 = vpack.c.b16 %v211, %v207
  %v324 = vpack.c.b16 %v212, %v208
  %v325 = vpack.c.b16 %v213, %v209
  %v326 = vpack.c.b16 %v214, %v210
  %v327 = vpack.c.b16 %v219, %v215
  %v328 = vpack.c.b16 %v220, %v216
  %v329 = vpack.c.b16 %v221, %v217
  %v330 = vpack.c.b16 %v222, %v218
  %v331 = vpack.c.b16 %v227, %v223
  %v332 = vpack.c.b16 %v228, %v224
  %v333 = vpack.c.b16 %v229, %v225
  %v334 = vpack.c.b16 %v230, %v226
  %v335 = vpack.c.b16 %v235, %v231
  %v336 = vpack.c.b16 %v236, %v232
  %v337 = vpack.c.b16 %v237, %v233
  %v338 = vpack.c.b16 %v238, %v234
  %v339 = vpack.c.b16 %v243, %v239
  %v340 = vpack.c.b16 %v244, %v240
  %v341 = vpack.c.b16 %v245, %v241
  %v342 = vpack.c.b16 %v246, %v242
  %v343 = vpack.c.b16 %v251, %v247
  %v344 = vpack.c.b16 %v252, %v248
  %v345 = vpack.c.b16 %v253, %v249
  %v346 = vpack.c.b16 %v254, %v250
  %v347 = vpack.c.b16 %v259, %v255
  %v348 = vpack.c.b16 %v260, %v256
  %v349 = vpack.c.b16 %v261, %v257
  %v350 = vpack.c.b16 %v262, %v258
  %v351 = vpack.c.b16 %v267, %v263
  %v352 = vpack.c.b16 %v268, %v264
  %v353 = vpack.c.b16 %v269, %v265
  %v354 = vpack.c.b16 %v270, %v266
  %v355 = vpack.c.b16 %v275, %v271
  %v356 = vpack.c.b16 %v276, %v272
  %v357 = vpack.c.b16 %v277, %v273
  %v358 = vpack.c.b16 %v278, %v274
  %v359 = vpack.c.b16 %v283, %v279
  %v360 = vpack.c.b16 %v284, %v280
  %v361 = vpack.c.b16 %v285, %v281
  %v362 = vpack.c.b16 %v286, %v282
  %v363 = vpack.c.b16 %v291, %v287
  %v364 = vpack.c.b16 %v292, %v288
  %v365 = vpack.c.b16 %v293, %v289
  %v366 = vpack.c.b16 %v294, %v290
  %v367 = vpack.c.b16 %v299, %v295
  %v368 = vpack.c.b16 %v300, %v296
  %v369 = vpack.c.b16 %v301, %v297
  %v370 = vpack.c.b16 %v302, %v298
  %v371 = vpack.c.b16 %v307, %v303
  %v372 = vpack.c.b16 %v308, %v304
  %v373 = vpack.c.b16 %v309, %v305
  %v374 = vpack.c.b16 %v310, %v306
  %439 = vmatprep.subr.bf16.mxu0 %v340
  %440 = vmatpush1.bf16.msra.mxu0 %v339
  %441 = vmatprep.subr.bf16.mxu0 %v336
  %442 = vmatpush1.bf16.msra.mxu0 %v335
  %443 = vmatprep.subr.bf16.mxu0 %v332
  %444 = vmatpush1.bf16.msra.mxu0 %v331
  %445 = vmatprep.subr.bf16.mxu0 %v328
  %446 = vmatpush1.bf16.msra.mxu0 %v327
  %447 = vmatprep.subr.bf16.mxu0 %v324
  %448 = vmatpush1.bf16.msra.mxu0 %v323
  %449 = vmatprep.subr.bf16.mxu0 %v320
  %450 = vmatpush1.bf16.msra.mxu0 %v319
  %451 = vmatprep.subr.bf16.mxu0 %v316
  %452 = vmatpush1.bf16.msra.mxu0 %v315
  %453 = vmatprep.subr.bf16.mxu0 %v312
  %454 = vmatpush1.bf16.msra.mxu0 %v311
  %455 = vmatprep.subr.bf16.mxu0 %v372
  %456 = vmatpush2.bf16.msra.mxu0 %v371
  %457 = vmatprep.subr.bf16.mxu0 %v368
  %458 = vmatpush2.bf16.msra.mxu0 %v367
  %459 = vmatprep.subr.bf16.mxu0 %v364
  %460 = vmatpush2.bf16.msra.mxu0 %v363
  %461 = vmatprep.subr.bf16.mxu0 %v360
  %462 = vmatpush2.bf16.msra.mxu0 %v359
  %463 = vmatprep.subr.bf16.mxu0 %v356
  %464 = vmatpush2.bf16.msra.mxu0 %v355
  %465 = vmatprep.subr.bf16.mxu0 %v352
  %466 = vmatpush2.bf16.msra.mxu0 %v351
  %467 = vmatprep.subr.bf16.mxu0 %v348
  %468 = vmatpush2.bf16.msra.mxu0 %v347
  %469 = vmatprep.subr.bf16.mxu0 %v344
  %470 = vmatpush2.bf16.msra.mxu0 %v343
  %471 = vmatprep.mubr.bf16.mxu0 %v116
  %472 = vmatmul.mubr.bf16.gmra.mxu0 %v115
  %v473 = vpop.f32.mrf.mxu0
  %v474 = vadd.f32 %v92, %v473
  %v475 = vpop.f32.mrf.mxu0
  %v476 = vadd.f32 %v96, %v475
  %v477 = vpop.f32.mrf.mxu0
  %v478 = vadd.f32 %v92, %v477
  %v479 = vpop.f32.mrf.mxu0
  %v480 = vadd.f32 %v96, %v479
  %481 = vdwg.mxu0
  %482 = vmatprep.subr.bf16.mxu0 %v342
  %483 = vmatpush1.bf16.msra.mxu0 %v341
  %484 = vmatprep.subr.bf16.mxu0 %v338
  %485 = vmatpush1.bf16.msra.mxu0 %v337
  %486 = vmatprep.subr.bf16.mxu0 %v334
  %487 = vmatpush1.bf16.msra.mxu0 %v333
  %488 = vmatprep.subr.bf16.mxu0 %v330
  %489 = vmatpush1.bf16.msra.mxu0 %v329
  %490 = vmatprep.subr.bf16.mxu0 %v326
  %491 = vmatpush1.bf16.msra.mxu0 %v325
  %492 = vmatprep.subr.bf16.mxu0 %v322
  %493 = vmatpush1.bf16.msra.mxu0 %v321
  %494 = vmatprep.subr.bf16.mxu0 %v318
  %495 = vmatpush1.bf16.msra.mxu0 %v317
  %496 = vmatprep.subr.bf16.mxu0 %v314
  %497 = vmatpush1.bf16.msra.mxu0 %v313
  %498 = vmatprep.subr.bf16.mxu0 %v374
  %499 = vmatpush2.bf16.msra.mxu0 %v373
  %500 = vmatprep.subr.bf16.mxu0 %v370
  %501 = vmatpush2.bf16.msra.mxu0 %v369
  %502 = vmatprep.subr.bf16.mxu0 %v366
  %503 = vmatpush2.bf16.msra.mxu0 %v365
  %504 = vmatprep.subr.bf16.mxu0 %v362
  %505 = vmatpush2.bf16.msra.mxu0 %v361
  %506 = vmatprep.subr.bf16.mxu0 %v358
  %507 = vmatpush2.bf16.msra.mxu0 %v357
  %508 = vmatprep.subr.bf16.mxu0 %v354
  %509 = vmatpush2.bf16.msra.mxu0 %v353
  %510 = vmatprep.subr.bf16.mxu0 %v350
  %511 = vmatpush2.bf16.msra.mxu0 %v349
  %512 = vmatprep.subr.bf16.mxu0 %v346
  %513 = vmatpush2.bf16.msra.mxu0 %v345
  %514 = vmatprep.mubr.bf16.mxu0 %v116
  %515 = vmatmul.mubr.bf16.gmra.mxu0 %v115
  %v516 = vpop.f32.mrf.mxu0
  %v517 = vadd.f32 %v100, %v516
  %v518 = vpop.f32.mrf.mxu0
  %v519 = vadd.f32 %v104, %v518
  %v520 = vpop.f32.mrf.mxu0
  %v521 = vadd.f32 %v100, %v520
  %v522 = vpop.f32.mrf.mxu0
  %v523 = vadd.f32 %v104, %v522
  %524 = vdwg.mxu0
  %v525 = vmax.f32 %v474, 0.0
  %v526 = vmax.f32 %v476, 0.0
  %v527 = vmax.f32 %v517, 0.0
  %v528 = vmax.f32 %v519, 0.0
  %v529 = vmax.f32 %v478, 0.0
  %v530 = vmax.f32 %v480, 0.0
  %v531 = vmax.f32 %v521, 0.0
  %v532 = vmax.f32 %v523, 0.0
  %v533 = vpack.c.bf16 %v529, %v525
  %v534 = vpack.c.bf16 %v530, %v526
  %v535 = vpack.c.bf16 %v531, %v527
  %v536 = vpack.c.bf16 %v532, %v528
  %v537 = vld [vmem:[%s3] sm:$0xf]
  %v538 = vld [vmem:[%s3 + $0x4] sm:$0xf]
  %v539 = vld [vmem:[%s3 + $0x8] sm:$0xf]
  %v540 = vld [vmem:[%s3 + $0xc] sm:$0xf]
  %v541 = vld [vmem:[%s3 + $0x10] sm:$0xf]
  %v542 = vld [vmem:[%s3 + $0x14] sm:$0xf]
  %v543 = vld [vmem:[%s3 + $0x18] sm:$0xf]
  %v544 = vld [vmem:[%s3 + $0x1c] sm:$0xf]
  %v545 = vld [vmem:[%s3 + $0x20] sm:$0xf]
  %v546 = vld [vmem:[%s3 + $0x24] sm:$0xf]
  %v547 = vld [vmem:[%s3 + $0x28] sm:$0xf]
  %v548 = vld [vmem:[%s3 + $0x2c] sm:$0xf]
  %v549 = vld [vmem:[%s3 + $0x30] sm:$0xf]
  %v550 = vld [vmem:[%s3 + $0x34] sm:$0xf]
  %v551 = vld [vmem:[%s3 + $0x38] sm:$0xf]
  %v552 = vld [vmem:[%s3 + $0x3c] sm:$0xf]
  %v553 = vld [vmem:[%s3 + $0x40] sm:$0xf]
  %v554 = vld [vmem:[%s3 + $0x44] sm:$0xf]
  %v555 = vld [vmem:[%s3 + $0x48] sm:$0xf]
  %v556 = vld [vmem:[%s3 + $0x4c] sm:$0xf]
  %v557 = vld [vmem:[%s3 + $0x50] sm:$0xf]
  %v558 = vld [vmem:[%s3 + $0x54] sm:$0xf]
  %v559 = vld [vmem:[%s3 + $0x58] sm:$0xf]
  %v560 = vld [vmem:[%s3 + $0x5c] sm:$0xf]
  %v561 = vld [vmem:[%s3 + $0x60] sm:$0xf]
  %v562 = vld [vmem:[%s3 + $0x64] sm:$0xf]
  %v563 = vld [vmem:[%s3 + $0x68] sm:$0xf]
  %v564 = vld [vmem:[%s3 + $0x6c] sm:$0xf]
  %v565 = vld [vmem:[%s3 + $0x70] sm:$0xf]
  %v566 = vld [vmem:[%s3 + $0x74] sm:$0xf]
  %v567 = vld [vmem:[%s3 + $0x78] sm:$0xf]
  %v568 = vld [vmem:[%s3 + $0x7c] sm:$0xf]
  %v569 = vld [vmem:[%s3 + $0x80] sm:$0xf]
  %v570 = vld [vmem:[%s3 + $0x84] sm:$0xf]
  %v571 = vld [vmem:[%s3 + $0x88] sm:$0xf]
  %v572 = vld [vmem:[%s3 + $0x8c] sm:$0xf]
  %v573 = vld [vmem:[%s3 + $0x90] sm:$0xf]
  %v574 = vld [vmem:[%s3 + $0x94] sm:$0xf]
  %v575 = vld [vmem:[%s3 + $0x98] sm:$0xf]
  %v576 = vld [vmem:[%s3 + $0x9c] sm:$0xf]
  %v577 = vld [vmem:[%s3 + $0xa0] sm:$0xf]
  %v578 = vld [vmem:[%s3 + $0xa4] sm:$0xf]
  %v579 = vld [vmem:[%s3 + $0xa8] sm:$0xf]
  %v580 = vld [vmem:[%s3 + $0xac] sm:$0xf]
  %v581 = vld [vmem:[%s3 + $0xb0] sm:$0xf]
  %v582 = vld [vmem:[%s3 + $0xb4] sm:$0xf]
  %v583 = vld [vmem:[%s3 + $0xb8] sm:$0xf]
  %v584 = vld [vmem:[%s3 + $0xbc] sm:$0xf]
  %v585 = vld [vmem:[%s3 + $0xc0] sm:$0xf]
  %v586 = vld [vmem:[%s3 + $0xc4] sm:$0xf]
  %v587 = vld [vmem:[%s3 + $0xc8] sm:$0xf]
  %v588 = vld [vmem:[%s3 + $0xcc] sm:$0xf]
  %v589 = vld [vmem:[%s3 + $0xd0] sm:$0xf]
  %v590 = vld [vmem:[%s3 + $0xd4] sm:$0xf]
  %v591 = vld [vmem:[%s3 + $0xd8] sm:$0xf]
  %v592 = vld [vmem:[%s3 + $0xdc] sm:$0xf]
  %v593 = vld [vmem:[%s3 + $0xe0] sm:$0xf]
  %v594 = vld [vmem:[%s3 + $0xe4] sm:$0xf]
  %v595 = vld [vmem:[%s3 + $0xe8] sm:$0xf]
  %v596 = vld [vmem:[%s3 + $0xec] sm:$0xf]
  %v597 = vld [vmem:[%s3 + $0xf0] sm:$0xf]
  %v598 = vld [vmem:[%s3 + $0xf4] sm:$0xf]
  %v599 = vld [vmem:[%s3 + $0xf8] sm:$0xf]
  %v600 = vld [vmem:[%s3 + $0xfc] sm:$0xf]
  %v601 = vld [vmem:[%s4] sm:$0x1]
  %v603 = vlaneseq
  %v604 = vshrl.u32 %v603, 7
  %v605 = vsub.s32 0, %v604
  %v606 = vrot.slane %v601, %v605
  %v672 = vunpack.c.l.b16 %v537
  %v673 = vunpack.c.l.b16 %v538
  %v674 = vunpack.c.l.b16 %v539
  %v675 = vunpack.c.l.b16 %v540
  %v676 = vunpack.c.l.b16 %v541
  %v677 = vunpack.c.l.b16 %v542
  %v678 = vunpack.c.l.b16 %v543
  %v679 = vunpack.c.l.b16 %v544
  %v680 = vunpack.c.l.b16 %v545
  %v681 = vunpack.c.l.b16 %v546
  %v682 = vunpack.c.l.b16 %v547
  %v683 = vunpack.c.l.b16 %v548
  %v684 = vunpack.c.l.b16 %v549
  %v685 = vunpack.c.l.b16 %v550
  %v686 = vunpack.c.l.b16 %v551
  %v687 = vunpack.c.l.b16 %v552
  %v688 = vunpack.c.l.b16 %v553
  %v689 = vunpack.c.l.b16 %v554
  %v690 = vunpack.c.l.b16 %v555
  %v691 = vunpack.c.l.b16 %v556
  %v692 = vunpack.c.l.b16 %v557
  %v693 = vunpack.c.l.b16 %v558
  %v694 = vunpack.c.l.b16 %v559
  %v695 = vunpack.c.l.b16 %v560
  %v696 = vunpack.c.l.b16 %v561
  %v697 = vunpack.c.l.b16 %v562
  %v698 = vunpack.c.l.b16 %v563
  %v699 = vunpack.c.l.b16 %v564
  %v700 = vunpack.c.l.b16 %v565
  %v701 = vunpack.c.l.b16 %v566
  %v702 = vunpack.c.l.b16 %v567
  %v703 = vunpack.c.l.b16 %v568
  %v704 = vunpack.c.l.b16 %v569
  %v705 = vunpack.c.l.b16 %v570
  %v706 = vunpack.c.l.b16 %v571
  %v707 = vunpack.c.l.b16 %v572
  %v708 = vunpack.c.l.b16 %v573
  %v709 = vunpack.c.l.b16 %v574
  %v710 = vunpack.c.l.b16 %v575
  %v711 = vunpack.c.l.b16 %v576
  %v712 = vunpack.c.l.b16 %v577
  %v713 = vunpack.c.l.b16 %v578
  %v714 = vunpack.c.l.b16 %v579
  %v715 = vunpack.c.l.b16 %v580
  %v716 = vunpack.c.l.b16 %v581
  %v717 = vunpack.c.l.b16 %v582
  %v718 = vunpack.c.l.b16 %v583
  %v719 = vunpack.c.l.b16 %v584
  %v720 = vunpack.c.l.b16 %v585
  %v721 = vunpack.c.l.b16 %v586
  %v722 = vunpack.c.l.b16 %v587
  %v723 = vunpack.c.l.b16 %v588
  %v724 = vunpack.c.l.b16 %v589
  %v725 = vunpack.c.l.b16 %v590
  %v726 = vunpack.c.l.b16 %v591
  %v727 = vunpack.c.l.b16 %v592
  %v728 = vunpack.c.l.b16 %v593
  %v729 = vunpack.c.l.b16 %v594
  %v730 = vunpack.c.l.b16 %v595
  %v731 = vunpack.c.l.b16 %v596
  %v732 = vunpack.c.l.b16 %v597
  %v733 = vunpack.c.l.b16 %v598
  %v734 = vunpack.c.l.b16 %v599
  %v735 = vunpack.c.l.b16 %v600
  %v736 = vpack.c.b16 %v673, %v672
  %v737 = vpack.c.b16 %v675, %v674
  %v738 = vpack.c.b16 %v677, %v676
  %v739 = vpack.c.b16 %v679, %v678
  %v740 = vpack.c.b16 %v681, %v680
  %v741 = vpack.c.b16 %v683, %v682
  %v742 = vpack.c.b16 %v685, %v684
  %v743 = vpack.c.b16 %v687, %v686
  %v744 = vpack.c.b16 %v689, %v688
  %v745 = vpack.c.b16 %v691, %v690
  %v746 = vpack.c.b16 %v693, %v692
  %v747 = vpack.c.b16 %v695, %v694
  %v748 = vpack.c.b16 %v697, %v696
  %v749 = vpack.c.b16 %v699, %v698
  %v750 = vpack.c.b16 %v701, %v700
  %v751 = vpack.c.b16 %v703, %v702
  %v752 = vpack.c.b16 %v705, %v704
  %v753 = vpack.c.b16 %v707, %v706
  %v754 = vpack.c.b16 %v709, %v708
  %v755 = vpack.c.b16 %v711, %v710
  %v756 = vpack.c.b16 %v713, %v712
  %v757 = vpack.c.b16 %v715, %v714
  %v758 = vpack.c.b16 %v717, %v716
  %v759 = vpack.c.b16 %v719, %v718
  %v760 = vpack.c.b16 %v721, %v720
  %v761 = vpack.c.b16 %v723, %v722
  %v762 = vpack.c.b16 %v725, %v724
  %v763 = vpack.c.b16 %v727, %v726
  %v764 = vpack.c.b16 %v729, %v728
  %v765 = vpack.c.b16 %v731, %v730
  %v766 = vpack.c.b16 %v733, %v732
  %v767 = vpack.c.b16 %v735, %v734
  %800 = vmatprep.subr.bf16.mxu0 0
  %801 = vmatpush1.bf16.msra.mxu0 %v743
  %802 = vmatprep.subr.bf16.mxu0 0
  %803 = vmatpush1.bf16.msra.mxu0 %v742
  %804 = vmatprep.subr.bf16.mxu0 0
  %805 = vmatpush1.bf16.msra.mxu0 %v741
  %806 = vmatprep.subr.bf16.mxu0 0
  %807 = vmatpush1.bf16.msra.mxu0 %v740
  %808 = vmatprep.subr.bf16.mxu0 0
  %809 = vmatpush1.bf16.msra.mxu0 %v739
  %810 = vmatprep.subr.bf16.mxu0 0
  %811 = vmatpush1.bf16.msra.mxu0 %v738
  %812 = vmatprep.subr.bf16.mxu0 0
  %813 = vmatpush1.bf16.msra.mxu0 %v737
  %814 = vmatprep.subr.bf16.mxu0 0
  %815 = vmatpush1.bf16.msra.mxu0 %v736
  %816 = vmatprep.subr.bf16.mxu0 0
  %817 = vmatpush2.bf16.msra.mxu0 %v751
  %818 = vmatprep.subr.bf16.mxu0 0
  %819 = vmatpush2.bf16.msra.mxu0 %v750
  %820 = vmatprep.subr.bf16.mxu0 0
  %821 = vmatpush2.bf16.msra.mxu0 %v749
  %822 = vmatprep.subr.bf16.mxu0 0
  %823 = vmatpush2.bf16.msra.mxu0 %v748
  %824 = vmatprep.subr.bf16.mxu0 0
  %825 = vmatpush2.bf16.msra.mxu0 %v747
  %826 = vmatprep.subr.bf16.mxu0 0
  %827 = vmatpush2.bf16.msra.mxu0 %v746
  %828 = vmatprep.subr.bf16.mxu0 0
  %829 = vmatpush2.bf16.msra.mxu0 %v745
  %830 = vmatprep.subr.bf16.mxu0 0
  %831 = vmatpush2.bf16.msra.mxu0 %v744
  %832 = vmatprep.mubr.bf16.mxu0 %v534
  %833 = vmatmul.mubr.bf16.gmra.mxu0 %v533
  %v834 = vpop.f32.mrf.mxu0
  %v835 = vadd.f32 %v606, %v834
  %v836 = vpop.f32.mrf.mxu0
  %v837 = vpop.f32.mrf.mxu0
  %v838 = vadd.f32 %v606, %v837
  %v839 = vpop.f32.mrf.mxu0
  %840 = vdwg.mxu0
  %841 = vmatprep.subr.bf16.mxu0 0
  %842 = vmatpush1.bf16.msra.mxu0 %v759
  %843 = vmatprep.subr.bf16.mxu0 0
  %844 = vmatpush1.bf16.msra.mxu0 %v758
  %845 = vmatprep.subr.bf16.mxu0 0
  %846 = vmatpush1.bf16.msra.mxu0 %v757
  %847 = vmatprep.subr.bf16.mxu0 0
  %848 = vmatpush1.bf16.msra.mxu0 %v756
  %849 = vmatprep.subr.bf16.mxu0 0
  %850 = vmatpush1.bf16.msra.mxu0 %v755
  %851 = vmatprep.subr.bf16.mxu0 0
  %852 = vmatpush1.bf16.msra.mxu0 %v754
  %853 = vmatprep.subr.bf16.mxu0 0
  %854 = vmatpush1.bf16.msra.mxu0 %v753
  %855 = vmatprep.subr.bf16.mxu0 0
  %856 = vmatpush1.bf16.msra.mxu0 %v752
  %857 = vmatprep.subr.bf16.mxu0 0
  %858 = vmatpush2.bf16.msra.mxu0 %v767
  %859 = vmatprep.subr.bf16.mxu0 0
  %860 = vmatpush2.bf16.msra.mxu0 %v766
  %861 = vmatprep.subr.bf16.mxu0 0
  %862 = vmatpush2.bf16.msra.mxu0 %v765
  %863 = vmatprep.subr.bf16.mxu0 0
  %864 = vmatpush2.bf16.msra.mxu0 %v764
  %865 = vmatprep.subr.bf16.mxu0 0
  %866 = vmatpush2.bf16.msra.mxu0 %v763
  %867 = vmatprep.subr.bf16.mxu0 0
  %868 = vmatpush2.bf16.msra.mxu0 %v762
  %869 = vmatprep.subr.bf16.mxu0 0
  %870 = vmatpush2.bf16.msra.mxu0 %v761
  %871 = vmatprep.subr.bf16.mxu0 0
  %872 = vmatpush2.bf16.msra.mxu0 %v760
  %873 = vmatprep.mubr.bf16.mxu0 %v536
  %874 = vmatmul.mubr.bf16.gmra.mxu0 %v535
  %v875 = vpop.f32.mrf.mxu0
  %v876 = vadd.f32 %v835, %v875
  %v877 = vpop.f32.mrf.mxu0
  %v878 = vpop.f32.mrf.mxu0
  %v879 = vadd.f32 %v838, %v878
  %v880 = vpop.f32.mrf.mxu0
  %881 = vdwg.mxu0
  %882 = vst [vmem:[%s5] sm:$0xff] %v876
  %883 = vst [vmem:[%s5 + $0x8] sm:$0xff] %v879
  // Predicated region
  $region22: #{custom_lid_forward.1} parent=0 // pred_check
    _
  $region23: #{custom_lid_forward.1} parent=0 // pred_check_branch
    %885 = sbr.rel (0) target = $region25
  $region24: #{custom_lid_forward.1} parent=0 // pred_region
    _
  $region25: #{custom_lid_forward.1} parent=0 // pred_fallthru
    _
  // Predicated region
  $region26: #{custom_lid_forward.1} parent=0 // pred_check
    _
  $region27: #{custom_lid_forward.1} parent=0 // pred_check_branch
    %887 = sbr.rel (0) target = $region29
  $region28: #{custom_lid_forward.1} parent=0 // pred_region
    _
  $region29: #{custom_lid_forward.1} parent=0 // pred_fallthru
    _

</llo_original>
